<compile_context>
chip_gen: v6e
topology: v6e:2x2x1
jax: 0.10.0
libtpu: 0.0.40
codegen_flags: <defaults>
</compile_context>

<pallas_src>
import functools

import jax
import jax.numpy as jnp
from jax.experimental import pallas as pl
from jax.experimental.pallas import tpu as pltpu

EPS = 1e-5
MOMENTUM = 0.1
_VMEM_LIMIT_BYTES = 32 * 1024 * 1024  # <= physical VMEM on v5e/v6e/v7x


def _pick_tile_hw(hw, c, budget_bytes=2 * 1024 * 1024):
    """Largest lane-dense (multiple-of-128) divisor of `hw` whose (C, tile)
    f32 footprint fits `budget_bytes`; falls back to the full dim (always a
    legal block shape)."""
    cap = max(128, budget_bytes // (4 * max(c, 1)))
    if hw <= cap:
        return hw
    if hw % 128 == 0:
        t = (min(cap, hw) // 128) * 128
        while t >= 128:
            if hw % t == 0:
                return t
            t -= 128
    return hw


def _stats_kernel(x_ref, rm_ref, rv_ref, rm_out, rv_out, inv_out,
                  sum_sc, sq_sc, *, momentum, eps, n_reduce):
    # x_ref: (1, C, TILE_HW) tile of the (N, C, H*W) view.
    n = pl.program_id(0)
    t = pl.program_id(1)

    @pl.when((n == 0) & (t == 0))
    def _init():
        sum_sc[...] = jnp.zeros_like(sum_sc)
        sq_sc[...] = jnp.zeros_like(sq_sc)

    x = x_ref[0].astype(jnp.float32)                      # (C, TILE_HW)
    sum_sc[...] += jnp.sum(x, axis=1, keepdims=True)      # (C, 1)
    sq_sc[...] += jnp.sum(x * x, axis=1, keepdims=True)   # (C, 1)

    @pl.when((n == pl.num_programs(0) - 1) & (t == pl.num_programs(1) - 1))
    def _finalize():
        s = sum_sc[...]
        mean = s * (1.0 / n_reduce)
        # Unbiased variance (matches torch.std()**2). Note: n_reduce == 1
        # divides by zero, mirroring torch's NaN behavior for that edge case.
        var = (sq_sc[...] - s * mean) / (n_reduce - 1.0)
        new_rm = rm_ref[...] * (1.0 - momentum) + momentum * mean
        new_rv = rv_ref[...] * (1.0 - momentum) + momentum * var
        rm_out[...] = new_rm
        rv_out[...] = new_rv
        # C precise reciprocals instead of C*L divisions in the normalize pass.
        inv_out[...] = pl.reciprocal(jnp.sqrt(new_rv) + eps)


def _normalize_kernel(x_ref, rm_ref, inv_ref, o_ref):
    x = x_ref[...].astype(jnp.float32)    # (1, C, TILE_HW)
    rm = rm_ref[...][None]                # (1, C, 1)
    inv = inv_ref[...][None]              # (1, C, 1)
    o_ref[...] = ((x - rm) * inv).astype(o_ref.dtype)


def norm_forward(x_nchw, running_mean, running_var,
                 momentum=MOMENTUM, eps=EPS):
    """x_nchw: (N, C, H, W). running_mean/var: (C,).

    Returns (out_nchw, new_running_mean, new_running_var) — the updated
    running statistics correspond to the module's in-place buffer updates.
    """
    N, C, H, W = x_nchw.shape
    HW = H * W
    L = N * HW

    # Free reshapes only — no HBM transpose round-trips.
    x3 = x_nchw.reshape(N, C, HW)
    rm = running_mean.reshape(C, 1).astype(jnp.float32)
    rv = running_var.reshape(C, 1).astype(jnp.float32)

    tile_hw = _pick_tile_hw(HW, C)
    n_hw = HW // tile_hw

    stats_kernel = functools.partial(
        _stats_kernel, momentum=momentum, eps=eps, n_reduce=float(L))

    new_rm, new_rv, inv = pl.pallas_call(
        stats_kernel,
        out_shape=(
            jax.ShapeDtypeStruct((C, 1), jnp.float32),
            jax.ShapeDtypeStruct((C, 1), jnp.float32),
            jax.ShapeDtypeStruct((C, 1), jnp.float32),
        ),
        grid=(N, n_hw),
        in_specs=[
            pl.BlockSpec((1, C, tile_hw), lambda n, t: (n, 0, t)),
            pl.BlockSpec((C, 1), lambda n, t: (0, 0)),
            pl.BlockSpec((C, 1), lambda n, t: (0, 0)),
        ],
        out_specs=(
            pl.BlockSpec((C, 1), lambda n, t: (0, 0)),
            pl.BlockSpec((C, 1), lambda n, t: (0, 0)),
            pl.BlockSpec((C, 1), lambda n, t: (0, 0)),
        ),
        scratch_shapes=[
            pltpu.VMEM((C, 1), jnp.float32),
            pltpu.VMEM((C, 1), jnp.float32),
        ],
        compiler_params=pltpu.CompilerParams(
            dimension_semantics=("arbitrary", "arbitrary"),
            vmem_limit_bytes=_VMEM_LIMIT_BYTES),
    )(x3, rm, rv)

    out3 = pl.pallas_call(
        _normalize_kernel,
        out_shape=jax.ShapeDtypeStruct((N, C, HW), x_nchw.dtype),
        grid=(N, n_hw),
        in_specs=[
            pl.BlockSpec((1, C, tile_hw), lambda n, t: (n, 0, t)),
            pl.BlockSpec((C, 1), lambda n, t: (0, 0)),
            pl.BlockSpec((C, 1), lambda n, t: (0, 0)),
        ],
        out_specs=pl.BlockSpec((1, C, tile_hw), lambda n, t: (n, 0, t)),
        compiler_params=pltpu.CompilerParams(
            dimension_semantics=("parallel", "parallel"),
            vmem_limit_bytes=_VMEM_LIMIT_BYTES),
    )(x3, new_rm, inv)

    return (out3.reshape(N, C, H, W),
            new_rm.reshape(C),
            new_rv.reshape(C))


def _reference(x, running_mean, running_var, momentum=MOMENTUM, eps=EPS):
    mean = jnp.mean(x, axis=(0, 2, 3), keepdims=True)
    var = jnp.var(x, axis=(0, 2, 3), keepdims=True, ddof=1)  # unbiased
    rm = running_mean.reshape(1, -1, 1, 1) * (1 - momentum) + momentum * mean
    rv = running_var.reshape(1, -1, 1, 1) * (1 - momentum) + momentum * var
    out = (x - rm) / (jnp.sqrt(rv) + eps)
    return out, rm.reshape(-1), rv.reshape(-1)


if __name__ == "__main__":
    key = jax.random.PRNGKey(0)
    N, C, H, W = 2, 4, 16, 16
    x = jax.random.normal(key, (N, C, H, W), dtype=jnp.float32)

    # Fresh buffers, deterministic (as after reset_running_stats()).
    running_mean = jnp.zeros((C,), dtype=jnp.float32)
    running_var = jnp.ones((C,), dtype=jnp.float32)

    out, new_rm, new_rv = norm_forward(x, running_mean, running_var)
    out = jax.block_until_ready(out)
    new_rm = jax.block_until_ready(new_rm)
    new_rv = jax.block_until_ready(new_rv)

    ref_out, ref_rm, ref_rv = _reference(x, running_mean, running_var)

    assert out.shape == x.shape and out.dtype == x.dtype
    assert jnp.allclose(out, ref_out, rtol=1e-5, atol=1e-5), "output mismatch"
    assert jnp.allclose(new_rm, ref_rm, rtol=1e-5, atol=1e-5), "running_mean mismatch"
    assert jnp.allclose(new_rv, ref_rv, rtol=1e-5, atol=1e-5), "running_var mismatch"

    print("KERNEL_OK")
</pallas_src>

<mosaic_0001>
module attributes {stable_mosaic.version = 11 : i64} {
  func.func @_stats_kernel(%arg0: i32, %arg1: i32, %arg2: memref<1x4x256xf32, #tpu.memory_space<vmem>>, %arg3: memref<4x1xf32, #tpu.memory_space<vmem>>, %arg4: memref<4x1xf32, #tpu.memory_space<vmem>>, %arg5: memref<4x1xf32, #tpu.memory_space<vmem>>, %arg6: memref<4x1xf32, #tpu.memory_space<vmem>>, %arg7: memref<4x1xf32, #tpu.memory_space<vmem>>, %arg8: memref<4x1xf32, #tpu.memory_space<vmem>>, %arg9: memref<4x1xf32, #tpu.memory_space<vmem>>) attributes {dimension_semantics = [#tpu.dimension_semantics<arbitrary>, #tpu.dimension_semantics<arbitrary>], iteration_bounds = array<i64: 2, 1>, scalar_prefetch = 0 : i64, scratch_operands = 2 : i64, tpu.core_type = #tpu.core_type<tc>, window_params = [{transform_indices = @transform_0, window_bounds = array<i64: 1, 4, 256>}, {pipeline_mode = #tpu.pipeline_mode<synchronous>, transform_indices = @transform_1, window_bounds = array<i64: 4, 1>}, {pipeline_mode = #tpu.pipeline_mode<synchronous>, transform_indices = @transform_2, window_bounds = array<i64: 4, 1>}, {pipeline_mode = #tpu.pipeline_mode<synchronous>, transform_indices = @transform_3, window_bounds = array<i64: 4, 1>}, {pipeline_mode = #tpu.pipeline_mode<synchronous>, transform_indices = @transform_4, window_bounds = array<i64: 4, 1>}, {pipeline_mode = #tpu.pipeline_mode<synchronous>, transform_indices = @transform_5, window_bounds = array<i64: 4, 1>}]} {
    %c0_i32 = arith.constant 0 : i32
    %0 = arith.cmpi eq, %arg0, %c0_i32 : i32
    %c0_i32_0 = arith.constant 0 : i32
    %1 = arith.cmpi eq, %arg1, %c0_i32_0 : i32
    %2 = arith.andi %0, %1 : i1
    %3 = arith.extui %2 : i1 to i32
    %c0_i32_1 = arith.constant 0 : i32
    %4 = arith.cmpi ne, %3, %c0_i32_1 : i32
    scf.if %4 {
      %cst_15 = arith.constant 0.000000e+00 : f32
      %23 = vector.broadcast %cst_15 : f32 to vector<4x1xf32>
      %c0_16 = arith.constant 0 : index
      %c0_17 = arith.constant 0 : index
      %24 = vector.load %arg8[%c0_16, %c0_17] : memref<4x1xf32, #tpu.memory_space<vmem>>, vector<4x1xf32>
      tpu.vector_store %arg8[%c0_16, %c0_17], %23 {strides = array<i32>} : memref<4x1xf32, #tpu.memory_space<vmem>>, vector<4x1xf32>,
      %cst_18 = arith.constant 0.000000e+00 : f32
      %25 = vector.broadcast %cst_18 : f32 to vector<4x1xf32>
      %c0_19 = arith.constant 0 : index
      %c0_20 = arith.constant 0 : index
      %26 = vector.load %arg9[%c0_19, %c0_20] : memref<4x1xf32, #tpu.memory_space<vmem>>, vector<4x1xf32>
      tpu.vector_store %arg9[%c0_19, %c0_20], %25 {strides = array<i32>} : memref<4x1xf32, #tpu.memory_space<vmem>>, vector<4x1xf32>,
    } else {
    }
    %c0 = arith.constant 0 : index
    %c0_2 = arith.constant 0 : index
    %c0_3 = arith.constant 0 : index
    %5 = vector.load %arg2[%c0, %c0_2, %c0_3] : memref<1x4x256xf32, #tpu.memory_space<vmem>>, vector<1x4x256xf32>
    %6 = vector.shape_cast %5 : vector<1x4x256xf32> to vector<4x256xf32>
    %c0_4 = arith.constant 0 : index
    %c0_5 = arith.constant 0 : index
    %7 = vector.load %arg8[%c0_4, %c0_5] : memref<4x1xf32, #tpu.memory_space<vmem>>, vector<4x1xf32>
    %cst = arith.constant dense<0.000000e+00> : vector<4xf32>
    %8 = vector.multi_reduction <add>, %6, %cst [1] : vector<4x256xf32> to vector<4xf32>
    %9 = vector.shape_cast %8 : vector<4xf32> to vector<4x1xf32>
    %10 = arith.addf %7, %9 : vector<4x1xf32>
    %c0_6 = arith.constant 0 : index
    %c0_7 = arith.constant 0 : index
    %11 = vector.load %arg8[%c0_6, %c0_7] : memref<4x1xf32, #tpu.memory_space<vmem>>, vector<4x1xf32>
    tpu.vector_store %arg8[%c0_6, %c0_7], %10 {strides = array<i32>} : memref<4x1xf32, #tpu.memory_space<vmem>>, vector<4x1xf32>,
    %c0_8 = arith.constant 0 : index
    %c0_9 = arith.constant 0 : index
    %12 = vector.load %arg9[%c0_8, %c0_9] : memref<4x1xf32, #tpu.memory_space<vmem>>, vector<4x1xf32>
    %13 = arith.mulf %6, %6 : vector<4x256xf32>
    %cst_10 = arith.constant dense<0.000000e+00> : vector<4xf32>
    %14 = vector.multi_reduction <add>, %13, %cst_10 [1] : vector<4x256xf32> to vector<4xf32>
    %15 = vector.shape_cast %14 : vector<4xf32> to vector<4x1xf32>
    %16 = arith.addf %12, %15 : vector<4x1xf32>
    %c0_11 = arith.constant 0 : index
    %c0_12 = arith.constant 0 : index
    %17 = vector.load %arg9[%c0_11, %c0_12] : memref<4x1xf32, #tpu.memory_space<vmem>>, vector<4x1xf32>
    tpu.vector_store %arg9[%c0_11, %c0_12], %16 {strides = array<i32>} : memref<4x1xf32, #tpu.memory_space<vmem>>, vector<4x1xf32>,
    %c1_i32 = arith.constant 1 : i32
    %18 = arith.cmpi eq, %arg0, %c1_i32 : i32
    %c0_i32_13 = arith.constant 0 : i32
    %19 = arith.cmpi eq, %arg1, %c0_i32_13 : i32
    %20 = arith.andi %18, %19 : i1
    %21 = arith.extui %20 : i1 to i32
    %c0_i32_14 = arith.constant 0 : i32
    %22 = arith.cmpi ne, %21, %c0_i32_14 : i32
    scf.if %22 {
      %c0_15 = arith.constant 0 : index
      %c0_16 = arith.constant 0 : index
      %23 = vector.load %arg8[%c0_15, %c0_16] : memref<4x1xf32, #tpu.memory_space<vmem>>, vector<4x1xf32>
      %cst_17 = arith.constant 0.001953125 : f32
      %24 = vector.broadcast %cst_17 : f32 to vector<4x1xf32>
      %25 = arith.mulf %23, %24 : vector<4x1xf32>
      %c0_18 = arith.constant 0 : index
      %c0_19 = arith.constant 0 : index
      %26 = vector.load %arg9[%c0_18, %c0_19] : memref<4x1xf32, #tpu.memory_space<vmem>>, vector<4x1xf32>
      %27 = arith.mulf %23, %25 : vector<4x1xf32>
      %28 = arith.subf %26, %27 : vector<4x1xf32>
      %cst_20 = arith.constant 5.110000e+02 : f32
      %29 = vector.broadcast %cst_20 : f32 to vector<4x1xf32>
      %30 = arith.divf %28, %29 : vector<4x1xf32>
      %c0_21 = arith.constant 0 : index
      %c0_22 = arith.constant 0 : index
      %31 = vector.load %arg3[%c0_21, %c0_22] : memref<4x1xf32, #tpu.memory_space<vmem>>, vector<4x1xf32>
      %cst_23 = arith.constant 0.899999976 : f32
      %32 = vector.broadcast %cst_23 : f32 to vector<4x1xf32>
      %33 = arith.mulf %31, %32 : vector<4x1xf32>
      %cst_24 = arith.constant 1.000000e-01 : f32
      %34 = vector.broadcast %cst_24 : f32 to vector<4x1xf32>
      %35 = arith.mulf %34, %25 : vector<4x1xf32>
      %36 = arith.addf %33, %35 : vector<4x1xf32>
      %c0_25 = arith.constant 0 : index
      %c0_26 = arith.constant 0 : index
      %37 = vector.load %arg4[%c0_25, %c0_26] : memref<4x1xf32, #tpu.memory_space<vmem>>, vector<4x1xf32>
      %cst_27 = arith.constant 0.899999976 : f32
      %38 = vector.broadcast %cst_27 : f32 to vector<4x1xf32>
      %39 = arith.mulf %37, %38 : vector<4x1xf32>
      %cst_28 = arith.constant 1.000000e-01 : f32
      %40 = vector.broadcast %cst_28 : f32 to vector<4x1xf32>
      %41 = arith.mulf %40, %30 : vector<4x1xf32>
      %42 = arith.addf %39, %41 : vector<4x1xf32>
      %c0_29 = arith.constant 0 : index
      %c0_30 = arith.constant 0 : index
      %43 = vector.load %arg5[%c0_29, %c0_30] : memref<4x1xf32, #tpu.memory_space<vmem>>, vector<4x1xf32>
      tpu.vector_store %arg5[%c0_29, %c0_30], %36 {strides = array<i32>} : memref<4x1xf32, #tpu.memory_space<vmem>>, vector<4x1xf32>,
      %c0_31 = arith.constant 0 : index
      %c0_32 = arith.constant 0 : index
      %44 = vector.load %arg6[%c0_31, %c0_32] : memref<4x1xf32, #tpu.memory_space<vmem>>, vector<4x1xf32>
      tpu.vector_store %arg6[%c0_31, %c0_32], %42 {strides = array<i32>} : memref<4x1xf32, #tpu.memory_space<vmem>>, vector<4x1xf32>,
      %45 = math.sqrt %42 : vector<4x1xf32>
      %cst_33 = arith.constant 9.99999974E-6 : f32
      %46 = vector.broadcast %cst_33 : f32 to vector<4x1xf32>
      %47 = arith.addf %45, %46 : vector<4x1xf32>
      %48 = tpu.reciprocal %47 : vector<4x1xf32> -> vector<4x1xf32>
      %c0_34 = arith.constant 0 : index
      %c0_35 = arith.constant 0 : index
      %49 = vector.load %arg7[%c0_34, %c0_35] : memref<4x1xf32, #tpu.memory_space<vmem>>, vector<4x1xf32>
      tpu.vector_store %arg7[%c0_34, %c0_35], %48 {strides = array<i32>} : memref<4x1xf32, #tpu.memory_space<vmem>>, vector<4x1xf32>,
    } else {
    }
    return
  }
  func.func @transform_0(%arg0: i32, %arg1: i32) -> (i32, i32, i32) {
    %c0_i32 = arith.constant 0 : i32
    %c0_i32_0 = arith.constant 0 : i32
    return %arg0, %c0_i32, %arg1 : i32, i32, i32
  }
  func.func @transform_1(%arg0: i32, %arg1: i32) -> (i32, i32) {
    %c0_i32 = arith.constant 0 : i32
    %c0_i32_0 = arith.constant 0 : i32
    %c0_i32_1 = arith.constant 0 : i32
    return %c0_i32, %c0_i32_0 : i32, i32
  }
  func.func @transform_2(%arg0: i32, %arg1: i32) -> (i32, i32) {
    %c0_i32 = arith.constant 0 : i32
    %c0_i32_0 = arith.constant 0 : i32
    %c0_i32_1 = arith.constant 0 : i32
    return %c0_i32, %c0_i32_0 : i32, i32
  }
  func.func @transform_3(%arg0: i32, %arg1: i32) -> (i32, i32) {
    %c0_i32 = arith.constant 0 : i32
    %c0_i32_0 = arith.constant 0 : i32
    %c0_i32_1 = arith.constant 0 : i32
    return %c0_i32, %c0_i32_0 : i32, i32
  }
  func.func @transform_4(%arg0: i32, %arg1: i32) -> (i32, i32) {
    %c0_i32 = arith.constant 0 : i32
    %c0_i32_0 = arith.constant 0 : i32
    %c0_i32_1 = arith.constant 0 : i32
    return %c0_i32, %c0_i32_0 : i32, i32
  }
  func.func @transform_5(%arg0: i32, %arg1: i32) -> (i32, i32) {
    %c0_i32 = arith.constant 0 : i32
    %c0_i32_0 = arith.constant 0 : i32
    %c0_i32_1 = arith.constant 0 : i32
    return %c0_i32, %c0_i32_0 : i32, i32
  }
}

</mosaic_0001>

<llo_original>
// kernel: tpu_custom_call.1
$region0: #{tpu_custom_call.1}
  #allocation0 [shape = 'u32[]', space=smem, size = 0x4, offset = 0x4, fixed_abs, tag = 'smem constant byte address 0x4 - core index']
  #allocation1 [shape = 'u32[144,128]{1,0:T(1,128)}', space=vmem, size = 0x12000, scoped, tag = 'internal scratch']
  #allocation2 [shape = 'f32[4,1]{1,0:T(4,128)}', space=vmem, size = 0x800, scoped, tag = 'scratch operand']
  #allocation3 [shape = 'f32[4,1]{1,0:T(4,128)}', space=vmem, size = 0x800, scoped, tag = 'scratch operand']
  %s0 = inlined_call_operand.hbm [shape: f32[2,4,256], index: 0, kind: input, shape index: {}]
  %s1 = inlined_call_operand.vmem [shape: f32[4,1], index: 1, kind: input, shape index: {}]
  %s2 = inlined_call_operand.vmem [shape: f32[4,1], index: 2, kind: input, shape index: {}]
  %s3 = inlined_call_operand.vmem [shape: f32[4,1], index: 3, kind: output, shape index: {0}]
  %s4 = inlined_call_operand.vmem [shape: f32[4,1], index: 4, kind: output, shape index: {1}]
  %s5 = inlined_call_operand.vmem [shape: f32[4,1], index: 5, kind: output, shape index: {2}]
  %6 = xla_tuple %s3, %s4, %s5
  %s7 = sld [smem:[#allocation0]]
  $region73: #{tpu_custom_call.1} parent=0
    _
  %s9 = ssub.s32 1, %s7
  %s10 = scalar_select 0, %s9, %s7
  $region1: #{tpu_custom_call.1} parent=0
    #allocation4 [shape = 'u8[8192]{0}', space=vmem, size = 0x2000, scoped, tag = 'input window, operand 0']
    #allocation5 [shape = 's32[2]{0}', space=sflag, size = 0x8, scoped, tag = 'scoped memory for tpu_custom_call.1']
    %11 = vsyncpa [#allocation5], 0
    %s12 = scalar_lea.sflag [#allocation5], 1
    %13 = vsyncpa %s12, 0
    loop: start=0, step=1, limit=4
    $region2: #{tpu_custom_call.1} parent=1 // loop_pre_header
      _
    $region3: #{tpu_custom_call.1} parent=1 // loop_header
      %s15 = sphi 0, %s19
      %p16 = scmp.ge.s32.totalorder %s15, 4
      %s22 = sphi 0, %s34
      %s23 = sphi 0, %s30
      %s24 = sphi 0, %s22
      %s25 = sphi 0, %s23
      %s26 = sphi 0, %s24
      %s27 = sphi 0, %s25
      %s39 = sphi 0, %s41
      %s42 = sphi 0, %s39
      %s43 = sphi 0, %s42
      %s59 = sphi 0, %s43
      %s63 = sphi 0, %s63
      %s65 = sphi 0, %s63
      %s66 = sphi 0, %s65
      %s80 = sphi 0, %s66
      %s84 = sphi 0, %s84
      %s86 = sphi 0, %s84
      %s87 = sphi 0, %s86
      %s101 = sphi 0, %s87
      %s105 = sphi 0, %s105
      %s107 = sphi 0, %s105
      %s108 = sphi 0, %s107
      %s122 = sphi 0, %s108
      %s126 = sphi 0, %s126
      %s128 = sphi 0, %s126
      %s129 = sphi 0, %s128
      %s143 = sphi 0, %s129
      %s147 = sphi 0, %s147
      %s149 = sphi 0, %s147
      %s150 = sphi 0, %s149
      %s164 = sphi 0, %s150
    $region4: #{tpu_custom_call.1} parent=1 // loop_header_branch
      %18 = sbr.rel (%p16) target = $region8
    $region5: #{tpu_custom_call.1} parent=1 // loop_body
      %s20 = ssub.s32 %s15, 1
      %s21 = ssub.s32 %s15, 2
      %s28 = sadd.s32 1, %s23
      %p29 = scmp.ge.s32.totalorder %s28, 1
      %s30 = scalar_select %p29, 0, %s28
      %s31 = sadd.s32 1, %s22
      %s32 = scalar_select %p29, %s31, %s22
      %p33 = scmp.ge.s32.totalorder %s32, 2
      %s34 = scalar_select %p33, 0, %s32
      %s35 = ssub.s32 %s22, %s34
      %s36 = ssub.s32 %s23, %s30
      %s37 = sor.u32 %s35, %s36
      %p38 = scmp.eq.s32.totalorder %s37, 0
      %s40 = sadd.s32 %s39, 1
      %s41 = scalar_select %p38, %s39, %s40
      %p44 = pneg %p38
      %p45 = scmp.eq.s32.totalorder %s15, 1
      %p46 = por %p44, %p45
      %p47 = scmp.ne.s32.totalorder %s39, %s42
      %p48 = scmp.eq.s32.totalorder %s15, 0
      %p49 = por %p47, %p48
      %p50 = scmp.ne.s32.totalorder %s39, %s42
      %p51 = scmp.eq.s32.totalorder %s20, 1
      %p52 = por %p50, %p51
      %p53 = scmp.ne.s32.totalorder %s42, %s43
      %p54 = scmp.eq.s32.totalorder %s20, 0
      %p55 = por %p53, %p54
      %p56 = scmp.ne.s32.totalorder %s42, %s43
      %p57 = scmp.eq.s32.totalorder %s21, 1
      %p58 = por %p56, %p57
      %p60 = scmp.ne.s32.totalorder %s43, %s59
      %p61 = scmp.eq.s32.totalorder %s21, 0
      %p62 = por %p60, %p61
      %s64 = sadd.s32 %s63, 1
      %p67 = scmp.eq.s32.totalorder %s15, 1
      %p68 = scmp.ne.s32.totalorder %s63, %s65
      %p69 = scmp.eq.s32.totalorder %s15, 0
      %p70 = por %p68, %p69
      %p71 = scmp.ne.s32.totalorder %s63, %s65
      %p72 = scmp.eq.s32.totalorder %s20, 1
      %p73 = por %p71, %p72
      %p74 = scmp.ne.s32.totalorder %s65, %s66
      %p75 = scmp.eq.s32.totalorder %s20, 0
      %p76 = por %p74, %p75
      %p77 = scmp.ne.s32.totalorder %s65, %s66
      %p78 = scmp.eq.s32.totalorder %s21, 1
      %p79 = por %p77, %p78
      %p81 = scmp.ne.s32.totalorder %s66, %s80
      %p82 = scmp.eq.s32.totalorder %s21, 0
      %p83 = por %p81, %p82
      %s85 = sadd.s32 %s84, 1
      %p88 = scmp.eq.s32.totalorder %s15, 1
      %p89 = scmp.ne.s32.totalorder %s84, %s86
      %p90 = scmp.eq.s32.totalorder %s15, 0
      %p91 = por %p89, %p90
      %p92 = scmp.ne.s32.totalorder %s84, %s86
      %p93 = scmp.eq.s32.totalorder %s20, 1
      %p94 = por %p92, %p93
      %p95 = scmp.ne.s32.totalorder %s86, %s87
      %p96 = scmp.eq.s32.totalorder %s20, 0
      %p97 = por %p95, %p96
      %p98 = scmp.ne.s32.totalorder %s86, %s87
      %p99 = scmp.eq.s32.totalorder %s21, 1
      %p100 = por %p98, %p99
      %p102 = scmp.ne.s32.totalorder %s87, %s101
      %p103 = scmp.eq.s32.totalorder %s21, 0
      %p104 = por %p102, %p103
      %s106 = sadd.s32 %s105, 1
      %p109 = scmp.eq.s32.totalorder %s15, 1
      %p110 = scmp.ne.s32.totalorder %s105, %s107
      %p111 = scmp.eq.s32.totalorder %s15, 0
      %p112 = por %p110, %p111
      %p113 = scmp.ne.s32.totalorder %s105, %s107
      %p114 = scmp.eq.s32.totalorder %s20, 1
      %p115 = por %p113, %p114
      %p116 = scmp.ne.s32.totalorder %s107, %s108
      %p117 = scmp.eq.s32.totalorder %s20, 0
      %p118 = por %p116, %p117
      %p119 = scmp.ne.s32.totalorder %s107, %s108
      %p120 = scmp.eq.s32.totalorder %s21, 1
      %p121 = por %p119, %p120
      %p123 = scmp.ne.s32.totalorder %s108, %s122
      %p124 = scmp.eq.s32.totalorder %s21, 0
      %p125 = por %p123, %p124
      %s127 = sadd.s32 %s126, 1
      %p130 = scmp.eq.s32.totalorder %s15, 1
      %p131 = scmp.ne.s32.totalorder %s126, %s128
      %p132 = scmp.eq.s32.totalorder %s15, 0
      %p133 = por %p131, %p132
      %p134 = scmp.ne.s32.totalorder %s126, %s128
      %p135 = scmp.eq.s32.totalorder %s20, 1
      %p136 = por %p134, %p135
      %p137 = scmp.ne.s32.totalorder %s128, %s129
      %p138 = scmp.eq.s32.totalorder %s20, 0
      %p139 = por %p137, %p138
      %p140 = scmp.ne.s32.totalorder %s128, %s129
      %p141 = scmp.eq.s32.totalorder %s21, 1
      %p142 = por %p140, %p141
      %p144 = scmp.ne.s32.totalorder %s129, %s143
      %p145 = scmp.eq.s32.totalorder %s21, 0
      %p146 = por %p144, %p145
      %s148 = sadd.s32 %s147, 1
      %p151 = scmp.eq.s32.totalorder %s15, 1
      %p152 = scmp.ne.s32.totalorder %s147, %s149
      %p153 = scmp.eq.s32.totalorder %s15, 0
      %p154 = por %p152, %p153
      %p155 = scmp.ne.s32.totalorder %s147, %s149
      %p156 = scmp.eq.s32.totalorder %s20, 1
      %p157 = por %p155, %p156
      %p158 = scmp.ne.s32.totalorder %s149, %s150
      %p159 = scmp.eq.s32.totalorder %s20, 0
      %p160 = por %p158, %p159
      %p161 = scmp.ne.s32.totalorder %s149, %s150
      %p162 = scmp.eq.s32.totalorder %s21, 1
      %p163 = por %p161, %p162
      %p165 = scmp.ne.s32.totalorder %s150, %s164
      %p166 = scmp.eq.s32.totalorder %s21, 0
      %p167 = por %p165, %p166
      %p168 = scmp.le.s32.totalorder 1, %s15
      %p169 = scmp.lt.s32.totalorder %s15, 3
      %p170 = pnand %p168, %p169
      %p171 = pneg %p170
      // Predicated region
      $region9: #{tpu_custom_call.1} parent=5 // pred_check
        _
      $region10: #{tpu_custom_call.1} parent=5 // pred_check_branch
        %173 = sbr.rel (%p170) target = $region12
      $region11: #{tpu_custom_call.1} parent=5 // pred_region
        %s174 = ssub.s32 %s15, 1
        // Predicated region
        $region13: #{tpu_custom_call.1} parent=11 // pred_check
          %p175 = pneg %p76
        $region14: #{tpu_custom_call.1} parent=11 // pred_check_branch
          %177 = sbr.rel (%p175) target = $region16
        $region15: #{tpu_custom_call.1} parent=11 // pred_region
          _
        $region16: #{tpu_custom_call.1} parent=11 // pred_fallthru
          _
        // Predicated region
        $region17: #{tpu_custom_call.1} parent=11 // pred_check
          %p178 = pneg %p97
        $region18: #{tpu_custom_call.1} parent=11 // pred_check_branch
          %180 = sbr.rel (%p178) target = $region20
        $region19: #{tpu_custom_call.1} parent=11 // pred_region
          _
        $region20: #{tpu_custom_call.1} parent=11 // pred_fallthru
          _
      $region12: #{tpu_custom_call.1} parent=5 // pred_fallthru
        _
      %p181 = scmp.lt.s32.totalorder %s15, 2
      // Predicated region
      $region21: #{tpu_custom_call.1} parent=5 // pred_check
        %p182 = pneg %p181
      $region22: #{tpu_custom_call.1} parent=5 // pred_check_branch
        %184 = sbr.rel (%p182) target = $region24
      $region23: #{tpu_custom_call.1} parent=5 // pred_region
        // Predicated region
        $region25: #{tpu_custom_call.1} parent=23 // pred_check
          %p185 = pneg %p49
        $region26: #{tpu_custom_call.1} parent=23 // pred_check_branch
          %187 = sbr.rel (%p185) target = $region28
        $region27: #{tpu_custom_call.1} parent=23 // pred_region
          %s188 = sand.u32 %s39, 1
          %s189 = scalar_lea.sflag [#allocation5], %s188
          %s190 = sand.u32 %s39, 1
          %s191 = smul.addr %s190, 8
          %s192 = scalar_lea.vmem [#allocation4], %s191
          %s193 = smul.u32 2, %s23
          %s195 = ssub.s32 128, 128
          %196 = vsyncadd %s189, %s195
          %s197 = smul.addr %s22, 2
          %s198 = sadd.s32 %s193, %s197
          %s199 = smul.addr %s198, 64
          %s200 = scalar_lea.hbm %s0, %s199
          %s202 = sshll.u32 %s192, 4
          %s203 = int_to_ptr.vmem [resolvable:$true] %s202
          %205 = dma.hbm_to_vmem [thread:$0]  %s200, 128, %s203, %s189
        $region28: #{tpu_custom_call.1} parent=23 // pred_fallthru
          _
      $region24: #{tpu_custom_call.1} parent=5 // pred_fallthru
        _
      %p206 = scmp.le.s32.totalorder 1, %s15
      %p207 = scmp.lt.s32.totalorder %s15, 3
      %p208 = pnand %p206, %p207
      %p209 = pneg %p208
      // Predicated region
      $region29: #{tpu_custom_call.1} parent=5 // pred_check
        _
      $region30: #{tpu_custom_call.1} parent=5 // pred_check_branch
        %211 = sbr.rel (%p208) target = $region32
      $region31: #{tpu_custom_call.1} parent=5 // pred_region
        %s212 = ssub.s32 %s15, 1
        %s213 = sand.u32 %s42, 1
        %s214 = scalar_lea.sflag [#allocation5], %s213
        %s215 = sand.u32 %s42, 1
        %s216 = smul.addr %s215, 8
        %s217 = scalar_lea.vmem [#allocation4], %s216
        // Predicated region
        $region33: #{tpu_custom_call.1} parent=31 // pred_check
          %p218 = pneg %p55
        $region34: #{tpu_custom_call.1} parent=31 // pred_check_branch
          %220 = sbr.rel (%p218) target = $region36
        $region35: #{tpu_custom_call.1} parent=31 // pred_region
          %221 = dma.done %s214, 128
        $region36: #{tpu_custom_call.1} parent=31 // pred_fallthru
          _
        %s222 = sand.u32 %s42, 1
        %s223 = scalar_lea.sflag [#allocation5], %s222
        %s224 = sand.u32 %s42, 1
        %s225 = smul.addr %s224, 8
        %s226 = scalar_lea.vmem [#allocation4], %s225
        %p227 = pneg %p55
        %p228 = pneg %p52
        %p229 = pneg %p76
        %p230 = pneg %p73
        %p231 = pneg %p97
        %p232 = pneg %p94
        %p233 = pneg %p118
        %p234 = pneg %p115
        %p235 = pneg %p139
        %p236 = pneg %p136
        %p237 = pneg %p160
        %p238 = pneg %p157
        %s239 = smul.u32 2, %s25
        %p240 = scmp.eq.s32.totalorder %s24, 0
        %p241 = scmp.eq.s32.totalorder %s25, 0
        %p242 = pnand %p240, %p241
        %p243 = pneg %p242
        // Predicated region
        $region37: #{tpu_custom_call.1} parent=31 // pred_check
          _
        $region38: #{tpu_custom_call.1} parent=31 // pred_check_branch
          %245 = sbr.rel (%p242) target = $region40
        $region39: #{tpu_custom_call.1} parent=31 // pred_region
          %vm246 = vcmask 3072
          %247 = vst.msk [vmem:[#allocation2] sm:$0xf] %vm246, 0.0
          %248 = vst.msk [vmem:[#allocation3] sm:$0xf] %vm246, 0.0
        $region40: #{tpu_custom_call.1} parent=31 // pred_fallthru
          _
        %v249 = vld [vmem:[%s217] sm:$0xff]
        %v250 = vld [vmem:[#allocation2] sm:$0xf]
        %v252 = vcombine.high %v249, %v249
        %vm254 = vcmask 1043456
        %v255 = vsel %vm254, %v249, 0.0
        %v256 = vsel %vm254, %v252, 0.0
        %v257 = vadd.f32 %v255, %v256
        %258 = vadd.xlane.f32.xlu0 %v257
        %v259 = vpop.xlane.xlu0 %258
        %v260 = vadd.f32 %v250, %v259
        %vm261 = vcmask 3072
        %262 = vst.msk [vmem:[#allocation2] sm:$0xf] %vm261, %v260
        %v263 = vld [vmem:[#allocation3] sm:$0xf]
        %v264 = vmul.f32 %v249, %v249
        %v266 = vcombine.high %v264, %v264
        %v268 = vsel %vm254, %v264, 0.0
        %v269 = vsel %vm254, %v266, 0.0
        %v270 = vadd.f32 %v268, %v269
        %271 = vadd.xlane.f32.xlu0 %v270
        %v272 = vpop.xlane.xlu0 %271
        %v273 = vadd.f32 %v263, %v272
        %274 = vst.msk [vmem:[#allocation3] sm:$0xf] %vm261, %v273
        %p275 = scmp.eq.s32.totalorder %s24, 1
        %p276 = pnand %p275, %p241
        %p277 = pneg %p276
        // Predicated region
        $region41: #{tpu_custom_call.1} parent=31 // pred_check
          _
        $region42: #{tpu_custom_call.1} parent=31 // pred_check_branch
          %279 = sbr.rel (%p276) target = $region44
        $region43: #{tpu_custom_call.1} parent=31 // pred_region
          %v280 = vld [vmem:[#allocation2] sm:$0xf]
          %v281 = vmul.f32 %v280, 0.001953125
          %v282 = vld [vmem:[#allocation3] sm:$0xf]
          %v283 = vmul.f32 %v280, %v281
          %v284 = vsub.f32 %v282, %v283
          %v285 = vrcp.pop 511.0
          %v286 = vmul.f32 %v284, %v285
          %v287 = vld [vmem:[%s1] sm:$0xf]
          %v288 = vmul.f32 %v287, 0.9
          %v289 = vmul.f32 %v281, 0.1
          %v290 = vadd.f32 %v288, %v289
          %v291 = vld [vmem:[%s2] sm:$0xf]
          %v292 = vmul.f32 %v291, 0.9
          %v293 = vmul.f32 %v286, 0.1
          %v294 = vadd.f32 %v292, %v293
          %295 = vst.msk [vmem:[%s3] sm:$0xf] %vm261, %v290
          %296 = vst.msk [vmem:[%s4] sm:$0xf] %vm261, %v294
          %v297 = vrsqrt.pop %v294
          %v298 = vmul.f32 %v294, %v297
          %vm299 = vcmp.eq.f32.partialorder %v294, inf
          %v300 = vsel %vm299, %v294, %v298
          %vm301 = vcmp.eq.f32.partialorder %v294, 0.0
          %v302 = vand.u32 %v294, 2147483648
          %v303 = vsel %vm301, %v302, %v300
          %v304 = vadd.f32 %v303, 1e-05
          %v305 = vrcp.pop %v304
          %306 = vst.msk [vmem:[%s5] sm:$0xf] %vm261, %v305
        $region44: #{tpu_custom_call.1} parent=31 // pred_fallthru
          _
        // Predicated region
        $region45: #{tpu_custom_call.1} parent=31 // pred_check
          %p307 = pneg %p115
        $region46: #{tpu_custom_call.1} parent=31 // pred_check_branch
          %309 = sbr.rel (%p307) target = $region48
        $region47: #{tpu_custom_call.1} parent=31 // pred_region
          _
        $region48: #{tpu_custom_call.1} parent=31 // pred_fallthru
          _
        // Predicated region
        $region49: #{tpu_custom_call.1} parent=31 // pred_check
          %p310 = pneg %p136
        $region50: #{tpu_custom_call.1} parent=31 // pred_check_branch
          %312 = sbr.rel (%p310) target = $region52
        $region51: #{tpu_custom_call.1} parent=31 // pred_region
          _
        $region52: #{tpu_custom_call.1} parent=31 // pred_fallthru
          _
        // Predicated region
        $region53: #{tpu_custom_call.1} parent=31 // pred_check
          %p313 = pneg %p157
        $region54: #{tpu_custom_call.1} parent=31 // pred_check_branch
          %315 = sbr.rel (%p313) target = $region56
        $region55: #{tpu_custom_call.1} parent=31 // pred_region
          _
        $region56: #{tpu_custom_call.1} parent=31 // pred_fallthru
          _
        // Predicated region
        $region57: #{tpu_custom_call.1} parent=31 // pred_check
          %p316 = pneg %p115
        $region58: #{tpu_custom_call.1} parent=31 // pred_check_branch
          %318 = sbr.rel (%p316) target = $region60
        $region59: #{tpu_custom_call.1} parent=31 // pred_region
          _
        $region60: #{tpu_custom_call.1} parent=31 // pred_fallthru
          _
        // Predicated region
        $region61: #{tpu_custom_call.1} parent=31 // pred_check
          %p319 = pneg %p136
        $region62: #{tpu_custom_call.1} parent=31 // pred_check_branch
          %321 = sbr.rel (%p319) target = $region64
        $region63: #{tpu_custom_call.1} parent=31 // pred_region
          _
        $region64: #{tpu_custom_call.1} parent=31 // pred_fallthru
          _
        // Predicated region
        $region65: #{tpu_custom_call.1} parent=31 // pred_check
          %p322 = pneg %p157
        $region66: #{tpu_custom_call.1} parent=31 // pred_check_branch
          %324 = sbr.rel (%p322) target = $region68
        $region67: #{tpu_custom_call.1} parent=31 // pred_region
          _
        $region68: #{tpu_custom_call.1} parent=31 // pred_fallthru
          _
      $region32: #{tpu_custom_call.1} parent=5 // pred_fallthru
        _
      %p325 = scmp.le.s32.totalorder 2, %s15
      // Predicated region
      $region69: #{tpu_custom_call.1} parent=5 // pred_check
        %p326 = pneg %p325
      $region70: #{tpu_custom_call.1} parent=5 // pred_check_branch
        %328 = sbr.rel (%p326) target = $region72
      $region71: #{tpu_custom_call.1} parent=5 // pred_region
        %s329 = ssub.s32 %s15, 2
      $region72: #{tpu_custom_call.1} parent=5 // pred_fallthru
        _
    $region6: #{tpu_custom_call.1} parent=1 // loop_footer
      %s19 = sadd.s32 1, %s15
    $region7: #{tpu_custom_call.1} parent=1 // loop_footer_branch
      %14 = sbr.rel target = $region3
    $region8: #{tpu_custom_call.1} parent=1 // loop_exit
      _
    %330 = vsyncpa [#allocation5], 1
    %s331 = scalar_lea.sflag [#allocation5], 1
    %332 = vsyncpa %s331, 1

</llo_original>
